<compile_context>
chip_gen: v7x
topology: tpu7x:2x2x1
jax: 0.10.0
libtpu: 0.0.40
codegen_flags: <defaults>
</compile_context>

<pallas_src>
import functools

import jax
import jax.numpy as jnp
from jax.experimental import pallas as pl
from jax.experimental.pallas import tpu as pltpu


def _round_up(x, m):
    return ((x + m - 1) // m) * m


def _ex2vec_kernel(scal_ref, uemb_ref, iemb_ref, misc_ref, rint_ref, out_ref):
    # scalar parameters (SMEM)
    global_lamb = scal_ref[0]
    alpha = scal_ref[1]
    beta = scal_ref[2]
    gamma = scal_ref[3]
    cutoff = scal_ref[4]

    # --- base distance: sum_d |item_emb - user_emb|  (sqrt(x^2) == |x|) ---------
    u_emb = uemb_ref[...]                                   # (D, tb)
    i_emb = iemb_ref[...]                                   # (D, tb)
    base_distance = jnp.sum(jnp.abs(i_emb - u_emb), axis=0, keepdims=True)  # (1, tb)

    # --- memory-decay base level over the interaction intervals -----------------
    r = rint_ref[...]                                       # (T, tb)
    pos = r > 0.0
    cut = jnp.clip(cutoff, 0.1, 100.0)
    delta_t = jnp.where(pos, r, 0.0) + cut                  # == r * mask + clamp(cutoff)
    base_level = jnp.sum(jnp.where(pos, jax.lax.rsqrt(delta_t), 0.0),
                         axis=0, keepdims=True)             # (1, tb)

    # --- per-user memory strength + interest score -------------------------------
    u_bias = misc_ref[0:1, :]                               # (1, tb)
    u_lamb = misc_ref[1:2, :]
    i_bias = misc_ref[2:3, :]

    lamb = jnp.clip(global_lamb, 0.01, 10.0) + jnp.clip(u_lamb, 0.1, 10.0)
    activation = jnp.minimum(base_level * lamb, base_distance)
    distance = base_distance - activation

    score = (alpha * distance
             + beta * distance * distance
             + gamma
             + u_bias
             + i_bias)                                       # (1, tb)
    out_ref[...] = jax.nn.sigmoid(score)


def ex2vec_forward(params, user_indices, item_indices, r_interval, *, block_b=2048):
    """Ex2Vec forward: XLA gathers + lane-dense tiled Pallas elementwise kernel."""
    user_indices = user_indices.astype(jnp.int32)
    item_indices = item_indices.astype(jnp.int32)
    r_interval = r_interval.astype(jnp.float32)

    B = user_indices.shape[0]
    T = r_interval.shape[1]
    D = params["embedding_user"].shape[1]

    # ---- batch tiling: lane-dense tiles (multiples of 128 lanes) ----------------
    TB = max(128, min(_round_up(block_b, 128), _round_up(B, 128)))
    B_pad = _round_up(B, TB)
    n_blocks = B_pad // TB
    pad = B_pad - B

    # ---- gathers hoisted to XLA; feed the kernel lane-dense (rows, B_pad) slabs -
    uemb_t = jnp.take(params["embedding_user"], user_indices, axis=0).T      # (D, B)
    iemb_t = jnp.take(params["embedding_item"], item_indices, axis=0).T      # (D, B)
    u_bias = jnp.take(params["user_bias"], user_indices, axis=0)[:, 0]       # (B,)
    u_lamb = jnp.take(params["user_lamb"], user_indices, axis=0)[:, 0]
    i_bias = jnp.take(params["item_bias"], item_indices, axis=0)[:, 0]

    uemb_t = jnp.pad(uemb_t, ((0, 0), (0, pad)))                             # (D, B_pad)
    iemb_t = jnp.pad(iemb_t, ((0, 0), (0, pad)))
    misc = jnp.zeros((8, B_pad), jnp.float32)                                # 8-row slab
    misc = misc.at[0, :B].set(u_bias).at[1, :B].set(u_lamb).at[2, :B].set(i_bias)
    rint_t = jnp.pad(r_interval.T, ((0, 0), (0, pad)))                       # (T, B_pad)

    scalars = jnp.stack([params["global_lamb"],
                         params["alpha"],
                         params["beta"],
                         params["gamma"],
                         params["cutoff"]]).astype(jnp.float32)              # (5,) -> SMEM

    cost = pl.CostEstimate(
        flops=int((4 * D + 6 * T + 24) * B_pad),
        transcendentals=int((T + 1) * B_pad),
        bytes_accessed=int(4 * B_pad * (2 * D + 8 + T + 1)),
    )

    out = pl.pallas_call(
        _ex2vec_kernel,
        out_shape=jax.ShapeDtypeStruct((1, B_pad), jnp.float32),
        grid_spec=pltpu.PrefetchScalarGridSpec(
            num_scalar_prefetch=0,
            grid=(n_blocks,),
            in_specs=[
                pl.BlockSpec(memory_space=pltpu.SMEM),             # scalars (5,)
                pl.BlockSpec((D, TB), lambda i: (0, i)),           # gathered user emb^T
                pl.BlockSpec((D, TB), lambda i: (0, i)),           # gathered item emb^T
                pl.BlockSpec((8, TB), lambda i: (0, i)),           # u_bias / u_lamb / i_bias
                pl.BlockSpec((T, TB), lambda i: (0, i)),           # r_interval^T
            ],
            out_specs=pl.BlockSpec((1, TB), lambda i: (0, i)),     # lane-dense output
        ),
        compiler_params=pltpu.CompilerParams(
            dimension_semantics=("parallel",),   # megacore: shard batch tiles on v7x
        ),
        cost_estimate=cost,
    )(scalars, uemb_t, iemb_t, misc, rint_t)

    return out[0, :B]                                              # (B,)


def init_params(key, n_users, n_items, latent_dim):
    """Deterministic synthetic initialization (matches module __init__ shapes)."""
    k1, k2, k3, k4, k5 = jax.random.split(key, 5)
    return {
        "global_lamb": jnp.array(1.0, jnp.float32),
        "alpha": jnp.array(1.0, jnp.float32),
        "beta": jnp.array(-0.065, jnp.float32),
        "gamma": jnp.array(0.5, jnp.float32),
        "cutoff": jnp.array(3.0, jnp.float32),
        "user_lamb": jax.random.normal(k1, (n_users, 1), jnp.float32),
        "user_bias": jax.random.normal(k2, (n_users, 1), jnp.float32),
        "item_bias": jax.random.normal(k3, (n_items, 1), jnp.float32),
        "embedding_user": jax.random.normal(k4, (n_users, latent_dim), jnp.float32),
        "embedding_item": jax.random.normal(k5, (n_items, latent_dim), jnp.float32),
    }


def _reference_forward(params, user_indices, item_indices, r_interval):
    """Pure-JAX reference mirroring the PyTorch forward exactly."""
    ue = jnp.take(params["embedding_user"], user_indices, axis=0)
    ie = jnp.take(params["embedding_item"], item_indices, axis=0)
    ub = jnp.take(params["user_bias"], user_indices, axis=0)[:, 0]
    ib = jnp.take(params["item_bias"], item_indices, axis=0)[:, 0]
    ul = jnp.take(params["user_lamb"], user_indices, axis=0)[:, 0]
    diff = ie - ue
    base_distance = jnp.sqrt(diff ** 2).sum(axis=1)
    mask = (r_interval > 0).astype(jnp.float32)
    delta_t = r_interval * mask + jnp.clip(params["cutoff"], 0.1, 100.0)
    base_level = jnp.sum(delta_t ** (-0.5) * mask, axis=1)
    lamb = jnp.clip(params["global_lamb"], 0.01, 10.0) + jnp.clip(ul, 0.1, 10.0)
    activation = jnp.minimum(base_level * lamb, base_distance)
    distance = base_distance - activation
    I = (params["alpha"] * distance + params["beta"] * distance ** 2
         + params["gamma"] + ub + ib)
    return jax.nn.sigmoid(I)


if __name__ == "__main__":
    N_USERS, N_ITEMS, LATENT_D = 10, 20, 32
    B, T = 8, 8

    key = jax.random.PRNGKey(0)
    kp, ku, ki, kr = jax.random.split(key, 4)

    params = init_params(kp, N_USERS, N_ITEMS, LATENT_D)

    user_indices = jax.random.randint(ku, (B,), 0, N_USERS, dtype=jnp.int32)
    item_indices = jax.random.randint(ki, (B,), 0, N_ITEMS, dtype=jnp.int32)
    # r_interval: mix of positive intervals and non-positive (masked-out) ones
    r_interval = jax.random.uniform(kr, (B, T), jnp.float32, -1.0, 10.0)

    interest = ex2vec_forward(params, user_indices, item_indices, r_interval)
    interest = jax.block_until_ready(interest)

    ref = _reference_forward(params, user_indices, item_indices, r_interval)
    assert interest.shape == (B,)
    # Gathers are exact f32 now; tolerance covers only reduction order and
    # EUP rsqrt/sigmoid rounding differences.
    assert jnp.allclose(interest, ref, atol=2e-5, rtol=2e-5)

    print("KERNEL_OK")
</pallas_src>

<mosaic_0001>
module attributes {stable_mosaic.version = 11 : i64} {
  func.func @_ex2vec_kernel(%arg0: i32, %arg1: memref<5xf32, #tpu.memory_space<smem>>, %arg2: memref<32x128xf32, #tpu.memory_space<vmem>>, %arg3: memref<32x128xf32, #tpu.memory_space<vmem>>, %arg4: memref<8x128xf32, #tpu.memory_space<vmem>>, %arg5: memref<8x128xf32, #tpu.memory_space<vmem>>, %arg6: memref<1x128xf32, #tpu.memory_space<vmem>>) attributes {dimension_semantics = [#tpu.dimension_semantics<parallel>], iteration_bounds = array<i64: 1>, scalar_prefetch = 0 : i64, scratch_operands = 0 : i64, tpu.core_type = #tpu.core_type<tc>, window_params = [{transform_indices = @transform_0, window_bounds = array<i64: 5>}, {transform_indices = @transform_1, window_bounds = array<i64: 32, 128>}, {transform_indices = @transform_2, window_bounds = array<i64: 32, 128>}, {transform_indices = @transform_3, window_bounds = array<i64: 8, 128>}, {transform_indices = @transform_4, window_bounds = array<i64: 8, 128>}, {transform_indices = @transform_5, window_bounds = array<i64: 1, 128>}]} {
    %c0 = arith.constant 0 : index
    %0 = memref.load %arg1[%c0] : memref<5xf32, #tpu.memory_space<smem>>
    %c1 = arith.constant 1 : index
    %1 = memref.load %arg1[%c1] : memref<5xf32, #tpu.memory_space<smem>>
    %c2 = arith.constant 2 : index
    %2 = memref.load %arg1[%c2] : memref<5xf32, #tpu.memory_space<smem>>
    %c3 = arith.constant 3 : index
    %3 = memref.load %arg1[%c3] : memref<5xf32, #tpu.memory_space<smem>>
    %c4 = arith.constant 4 : index
    %4 = memref.load %arg1[%c4] : memref<5xf32, #tpu.memory_space<smem>>
    %c0_0 = arith.constant 0 : index
    %c0_1 = arith.constant 0 : index
    %5 = vector.load %arg2[%c0_0, %c0_1] : memref<32x128xf32, #tpu.memory_space<vmem>>, vector<32x128xf32>
    %c0_2 = arith.constant 0 : index
    %c0_3 = arith.constant 0 : index
    %6 = vector.load %arg3[%c0_2, %c0_3] : memref<32x128xf32, #tpu.memory_space<vmem>>, vector<32x128xf32>
    %7 = arith.subf %6, %5 : vector<32x128xf32>
    %8 = math.absf %7 : vector<32x128xf32>
    %cst = arith.constant dense<0.000000e+00> : vector<128xf32>
    %9 = vector.multi_reduction <add>, %8, %cst [0] : vector<32x128xf32> to vector<128xf32>
    %10 = vector.shape_cast %9 : vector<128xf32> to vector<1x128xf32>
    %c0_4 = arith.constant 0 : index
    %c0_5 = arith.constant 0 : index
    %11 = vector.load %arg5[%c0_4, %c0_5] : memref<8x128xf32, #tpu.memory_space<vmem>>, vector<8x128xf32>
    %cst_6 = arith.constant 0.000000e+00 : f32
    %12 = vector.broadcast %cst_6 : f32 to vector<8x128xf32>
    %13 = arith.cmpf ogt, %11, %12 : vector<8x128xf32>
    %cst_7 = arith.constant 1.000000e-01 : f32
    %cst_8 = arith.constant 1.000000e+02 : f32
    %14 = arith.maximumf %cst_7, %4 : f32
    %15 = arith.minimumf %cst_8, %14 : f32
    %cst_9 = arith.constant 0.000000e+00 : f32
    %16 = vector.broadcast %cst_9 : f32 to vector<8x128xf32>
    %17 = arith.select %13, %11, %16 : vector<8x128xi1>, vector<8x128xf32>
    %18 = vector.broadcast %15 : f32 to vector<8x128xf32>
    %19 = arith.addf %17, %18 : vector<8x128xf32>
    %20 = math.rsqrt %19 : vector<8x128xf32>
    %cst_10 = arith.constant 0.000000e+00 : f32
    %21 = vector.broadcast %cst_10 : f32 to vector<8x128xf32>
    %22 = arith.select %13, %20, %21 : vector<8x128xi1>, vector<8x128xf32>
    %cst_11 = arith.constant dense<0.000000e+00> : vector<128xf32>
    %23 = vector.multi_reduction <add>, %22, %cst_11 [0] : vector<8x128xf32> to vector<128xf32>
    %24 = vector.shape_cast %23 : vector<128xf32> to vector<1x128xf32>
    %c0_12 = arith.constant 0 : index
    %c0_13 = arith.constant 0 : index
    %25 = vector.load %arg4[%c0_12, %c0_13] : memref<8x128xf32, #tpu.memory_space<vmem>>, vector<1x128xf32>
    %c1_14 = arith.constant 1 : index
    %c0_15 = arith.constant 0 : index
    %26 = vector.load %arg4[%c1_14, %c0_15] : memref<8x128xf32, #tpu.memory_space<vmem>>, vector<1x128xf32>
    %c2_16 = arith.constant 2 : index
    %c0_17 = arith.constant 0 : index
    %27 = vector.load %arg4[%c2_16, %c0_17] : memref<8x128xf32, #tpu.memory_space<vmem>>, vector<1x128xf32>
    %cst_18 = arith.constant 0.00999999977 : f32
    %cst_19 = arith.constant 1.000000e+01 : f32
    %28 = arith.maximumf %cst_18, %0 : f32
    %29 = arith.minimumf %cst_19, %28 : f32
    %cst_20 = arith.constant 1.000000e-01 : f32
    %cst_21 = arith.constant 1.000000e+01 : f32
    %30 = vector.broadcast %cst_20 : f32 to vector<1x128xf32>
    %31 = arith.maximumf %30, %26 : vector<1x128xf32>
    %32 = vector.broadcast %cst_21 : f32 to vector<1x128xf32>
    %33 = arith.minimumf %32, %31 : vector<1x128xf32>
    %34 = vector.broadcast %29 : f32 to vector<1x128xf32>
    %35 = arith.addf %34, %33 : vector<1x128xf32>
    %36 = arith.mulf %24, %35 : vector<1x128xf32>
    %37 = arith.minimumf %36, %10 : vector<1x128xf32>
    %38 = arith.subf %10, %37 : vector<1x128xf32>
    %39 = vector.broadcast %1 : f32 to vector<1x128xf32>
    %40 = arith.mulf %39, %38 : vector<1x128xf32>
    %41 = vector.broadcast %2 : f32 to vector<1x128xf32>
    %42 = arith.mulf %41, %38 : vector<1x128xf32>
    %43 = arith.mulf %42, %38 : vector<1x128xf32>
    %44 = arith.addf %40, %43 : vector<1x128xf32>
    %45 = vector.broadcast %3 : f32 to vector<1x128xf32>
    %46 = arith.addf %44, %45 : vector<1x128xf32>
    %47 = arith.addf %46, %25 : vector<1x128xf32>
    %48 = arith.addf %47, %27 : vector<1x128xf32>
    %49 = arith.negf %48 : vector<1x128xf32>
    %50 = math.exp %49 : vector<1x128xf32>
    %cst_22 = arith.constant 1.000000e+00 : f32
    %51 = vector.broadcast %cst_22 : f32 to vector<1x128xf32>
    %52 = arith.addf %51, %50 : vector<1x128xf32>
    %53 = arith.divf %51, %52 : vector<1x128xf32>
    %c0_23 = arith.constant 0 : index
    %c0_24 = arith.constant 0 : index
    %54 = vector.load %arg6[%c0_23, %c0_24] : memref<1x128xf32, #tpu.memory_space<vmem>>, vector<1x128xf32>
    tpu.vector_store %arg6[%c0_23, %c0_24], %53 {strides = array<i32>} : memref<1x128xf32, #tpu.memory_space<vmem>>, vector<1x128xf32>,
    return
  }
  func.func @transform_0(%arg0: i32) -> i32 {
    %c0_i32 = arith.constant 0 : i32
    %c0_i32_0 = arith.constant 0 : i32
    return %c0_i32 : i32
  }
  func.func @transform_1(%arg0: i32) -> (i32, i32) {
    %c0_i32 = arith.constant 0 : i32
    %c0_i32_0 = arith.constant 0 : i32
    return %c0_i32, %arg0 : i32, i32
  }
  func.func @transform_2(%arg0: i32) -> (i32, i32) {
    %c0_i32 = arith.constant 0 : i32
    %c0_i32_0 = arith.constant 0 : i32
    return %c0_i32, %arg0 : i32, i32
  }
  func.func @transform_3(%arg0: i32) -> (i32, i32) {
    %c0_i32 = arith.constant 0 : i32
    %c0_i32_0 = arith.constant 0 : i32
    return %c0_i32, %arg0 : i32, i32
  }
  func.func @transform_4(%arg0: i32) -> (i32, i32) {
    %c0_i32 = arith.constant 0 : i32
    %c0_i32_0 = arith.constant 0 : i32
    return %c0_i32, %arg0 : i32, i32
  }
  func.func @transform_5(%arg0: i32) -> (i32, i32) {
    %c0_i32 = arith.constant 0 : i32
    %c0_i32_0 = arith.constant 0 : i32
    return %c0_i32, %arg0 : i32, i32
  }
}

</mosaic_0001>

<llo_original>
// kernel: tpu_custom_call.1
$region0: #{tpu_custom_call.1}
  #allocation0 [shape = 'u32[]', space=smem, size = 0x4, offset = 0x4, fixed_abs, tag = 'smem constant byte address 0x4 - core index']
  #allocation1 [shape = 'u32[144,128]{1,0:T(1,128)}', space=vmem, size = 0x12000, scoped, tag = 'internal scratch']
  %s0 = inlined_call_operand.hbm [shape: f32[5], index: 0, kind: input, shape index: {}]
  %s1 = inlined_call_operand.hbm [shape: f32[32,128], index: 1, kind: input, shape index: {}]
  %s2 = inlined_call_operand.hbm [shape: f32[32,128], index: 2, kind: input, shape index: {}]
  %s3 = inlined_call_operand.vmem [shape: f32[8,128], index: 3, kind: input, shape index: {}]
  %s4 = inlined_call_operand.hbm [shape: f32[8,128], index: 4, kind: input, shape index: {}]
  %s5 = inlined_call_operand.hbm [shape: f32[1,128], index: 5, kind: output, shape index: {}]
  %s6 = sld [smem:[#allocation0]]
  $region46: #{tpu_custom_call.1} parent=0
    _
  %s8 = ssub.s32 1, %s6
  %s9 = scalar_select 0, %s8, %s6
  $region1: #{tpu_custom_call.1} parent=0
    #allocation2 [shape = 'u8[512]{0}', space=smem, size = 0x200, scoped, tag = 'input window, operand 0, single buffered']
    #allocation3 [shape = 's32[1]{0}', space=sflag, size = 0x4, scoped, tag = 'scoped memory for tpu_custom_call.1']
    #allocation4 [shape = 's32[1]{0}', space=sflag, size = 0x4, scoped, tag = 'scoped memory for tpu_custom_call.1']
    #allocation5 [shape = 's32[1]{0}', space=sflag, size = 0x4, scoped, tag = 'scoped memory for tpu_custom_call.1']
    #allocation6 [shape = 'u8[16384]{0}', space=vmem, size = 0x4000, scoped, tag = 'input window, operand 1, single buffered']
    #allocation7 [shape = 'u8[16384]{0}', space=vmem, size = 0x4000, scoped, tag = 'input window, operand 2, single buffered']
    #allocation8 [shape = 's32[1]{0}', space=sflag, size = 0x4, scoped, tag = 'scoped memory for tpu_custom_call.1']
    #allocation9 [shape = 'u8[4096]{0}', space=vmem, size = 0x1000, scoped, tag = 'input window, operand 4, single buffered']
    #allocation10 [shape = 'u8[512]{0}', space=vmem, size = 0x400, scoped, tag = 'output window, operand 0, single buffered']
    %10 = vsyncpa [#allocation5], 0
    %11 = vsyncpa [#allocation3], 0
    %12 = vsyncpa [#allocation8], 0
    %13 = vsyncpa [#allocation4], 0
    // Predicated region
    $region2: #{tpu_custom_call.1} parent=1 // pred_check
      _
    $region3: #{tpu_custom_call.1} parent=1 // pred_check_branch
      %15 = sbr.rel (0) target = $region5
    $region4: #{tpu_custom_call.1} parent=1 // pred_region
      %s17 = ssub.s32 16, 16
      %18 = vsyncadd [#allocation5], %s17
      %21 = dma.hbm_to_smem %s0, 16, [#allocation2], [#allocation5]
    $region5: #{tpu_custom_call.1} parent=1 // pred_fallthru
      _
    // Predicated region
    $region6: #{tpu_custom_call.1} parent=1 // pred_check
      _
    $region7: #{tpu_custom_call.1} parent=1 // pred_check_branch
      %23 = sbr.rel (0) target = $region9
    $region8: #{tpu_custom_call.1} parent=1 // pred_region
      %s25 = ssub.s32 512, 512
      %26 = vsyncadd [#allocation3], %s25
      %s27 = sshll.u32 [#allocation6], 4
      %s28 = int_to_ptr.vmem [resolvable:$true] %s27
      %33 = dma.hbm_to_vmem [thread:$0]  %s1, 512, %s28, [#allocation3], 128, 128, 8
    $region9: #{tpu_custom_call.1} parent=1 // pred_fallthru
      _
    // Predicated region
    $region10: #{tpu_custom_call.1} parent=1 // pred_check
      _
    $region11: #{tpu_custom_call.1} parent=1 // pred_check_branch
      %35 = sbr.rel (0) target = $region13
    $region12: #{tpu_custom_call.1} parent=1 // pred_region
      %s37 = ssub.s32 512, 512
      %38 = vsyncadd [#allocation8], %s37
      %s39 = sshll.u32 [#allocation7], 4
      %s40 = int_to_ptr.vmem [resolvable:$true] %s39
      %45 = dma.hbm_to_vmem [thread:$0]  %s2, 512, %s40, [#allocation8], 128, 128, 8
    $region13: #{tpu_custom_call.1} parent=1 // pred_fallthru
      _
    // Predicated region
    $region14: #{tpu_custom_call.1} parent=1 // pred_check
      _
    $region15: #{tpu_custom_call.1} parent=1 // pred_check_branch
      %47 = sbr.rel (0) target = $region17
    $region16: #{tpu_custom_call.1} parent=1 // pred_region
      _
    $region17: #{tpu_custom_call.1} parent=1 // pred_fallthru
      _
    // Predicated region
    $region18: #{tpu_custom_call.1} parent=1 // pred_check
      _
    $region19: #{tpu_custom_call.1} parent=1 // pred_check_branch
      %49 = sbr.rel (0) target = $region21
    $region20: #{tpu_custom_call.1} parent=1 // pred_region
      %s51 = ssub.s32 128, 128
      %52 = vsyncadd [#allocation8], %s51
      %s54 = sshll.u32 [#allocation9], 4
      %s55 = int_to_ptr.vmem [resolvable:$true] %s54
      %57 = dma.hbm_to_vmem [thread:$0]  %s4, 128, %s55, [#allocation8]
    $region21: #{tpu_custom_call.1} parent=1 // pred_fallthru
      _
    // Predicated region
    $region22: #{tpu_custom_call.1} parent=1 // pred_check
      _
    $region23: #{tpu_custom_call.1} parent=1 // pred_check_branch
      %59 = sbr.rel (0) target = $region25
    $region24: #{tpu_custom_call.1} parent=1 // pred_region
      %60 = dma.done [#allocation5], 16
    $region25: #{tpu_custom_call.1} parent=1 // pred_fallthru
      _
    // Predicated region
    $region26: #{tpu_custom_call.1} parent=1 // pred_check
      _
    $region27: #{tpu_custom_call.1} parent=1 // pred_check_branch
      %62 = sbr.rel (0) target = $region29
    $region28: #{tpu_custom_call.1} parent=1 // pred_region
      %63 = dma.done [#allocation3], 512
    $region29: #{tpu_custom_call.1} parent=1 // pred_fallthru
      _
    // Predicated region
    $region30: #{tpu_custom_call.1} parent=1 // pred_check
      _
    $region31: #{tpu_custom_call.1} parent=1 // pred_check_branch
      %65 = sbr.rel (0) target = $region33
    $region32: #{tpu_custom_call.1} parent=1 // pred_region
      %66 = dma.done [#allocation8], 512
    $region33: #{tpu_custom_call.1} parent=1 // pred_fallthru
      _
    // Predicated region
    $region34: #{tpu_custom_call.1} parent=1 // pred_check
      _
    $region35: #{tpu_custom_call.1} parent=1 // pred_check_branch
      %68 = sbr.rel (0) target = $region37
    $region36: #{tpu_custom_call.1} parent=1 // pred_region
      %69 = dma.done [#allocation8], 128
    $region37: #{tpu_custom_call.1} parent=1 // pred_fallthru
      _
    %70 = sfence
    %s71 = sld [smem:[#allocation2]]
    %s72 = sld [smem:[#allocation2 + $0x1]]
    %s73 = sld [smem:[#allocation2 + $0x2]]
    %s74 = sld [smem:[#allocation2 + $0x3]]
    %s75 = sld [smem:[#allocation2 + $0x4]]
    %v76 = vld [vmem:[#allocation6] sm:$0xff]
    %v77 = vld [vmem:[#allocation6 + $0x8] sm:$0xff]
    %v78 = vld [vmem:[#allocation6 + $0x10] sm:$0xff]
    %v79 = vld [vmem:[#allocation6 + $0x18] sm:$0xff]
    %v80 = vld [vmem:[#allocation7] sm:$0xff]
    %v81 = vld [vmem:[#allocation7 + $0x8] sm:$0xff]
    %v82 = vld [vmem:[#allocation7 + $0x10] sm:$0xff]
    %v83 = vld [vmem:[#allocation7 + $0x18] sm:$0xff]
    %v84 = vsub.f32 %v80, %v76
    %v85 = vsub.f32 %v81, %v77
    %v86 = vsub.f32 %v82, %v78
    %v87 = vsub.f32 %v83, %v79
    %v88 = vand.u32 2147483647, %v84
    %v89 = vand.u32 2147483647, %v85
    %v90 = vand.u32 2147483647, %v86
    %v91 = vand.u32 2147483647, %v87
    %v92 = vadd.f32 %v88, %v89
    %v93 = vadd.f32 %v92, %v90
    %v94 = vadd.f32 %v93, %v91
    %v95 = vrot.slane %v94, 4
    %v96 = vadd.f32 %v94, %v95
    %v97 = vrot.slane %v96, 2
    %v98 = vadd.f32 %v96, %v97
    %v99 = vrot.slane %v98, 1
    %v100 = vadd.f32 %v98, %v99
    %v101 = vld [vmem:[#allocation9] sm:$0xff]
    %vm102 = vcmp.gt.f32.partialorder %v101, 0.0
    %s103 = smax.f32 %s75, 0.1
    %s104 = smin.f32 %s103, 100.0
    %v105 = vsel %vm102, %v101, 0.0
    %v106 = vstv %s104
    %v107 = vadd.f32 %v105, %v106
    %v108 = vrsqrt.pop %v107
    %v109 = vsel %vm102, %v108, 0.0
    %v110 = vrot.slane %v109, 4
    %v111 = vadd.f32 %v109, %v110
    %v112 = vrot.slane %v111, 2
    %v113 = vadd.f32 %v111, %v112
    %v114 = vrot.slane %v113, 1
    %v115 = vadd.f32 %v113, %v114
    %v116 = vld [vmem:[%s3] sm:$0x1]
    %v117 = vld [vmem:[%s3 + $0x1] sm:$0x1]
    %v118 = vld [vmem:[%s3 + $0x2] sm:$0x1]
    %s119 = smax.f32 %s71, 0.01
    %s120 = smin.f32 %s119, 10.0
    %v121 = vmax.f32 %v117, 0.1
    %v122 = vmin.f32 %v121, 10.0
    %v123 = vstv %s120
    %v124 = vadd.f32 %v123, %v122
    %v125 = vmul.f32 %v115, %v124
    %v126 = vmin.f32 %v125, %v100
    %v127 = vsub.f32 %v100, %v126
    %v128 = vstv %s72
    %v129 = vmul.f32 %v128, %v127
    %v130 = vstv %s73
    %v131 = vmul.f32 %v130, %v127
    %v132 = vmul.f32 %v131, %v127
    %v133 = vadd.f32 %v129, %v132
    %v134 = vstv %s74
    %v135 = vadd.f32 %v133, %v134
    %v136 = vadd.f32 %v135, %v116
    %v137 = vadd.f32 %v136, %v118
    %v138 = vxor.u32 %v137, 2147483648
    %v139 = vmul.f32 %v138, 1.442695
    %v140 = vpow.pop %v139
    %v141 = vadd.f32 %v140, 1.0
    %v142 = vrcp.pop %v141
    %v143 = vmul.f32 1.0, %v142
    %144 = vst [vmem:[#allocation10] sm:$0x1] %v143
    // Predicated region
    $region38: #{tpu_custom_call.1} parent=1 // pred_check
      _
    $region39: #{tpu_custom_call.1} parent=1 // pred_check_branch
      %146 = sbr.rel (0) target = $region41
    $region40: #{tpu_custom_call.1} parent=1 // pred_region
      %s148 = ssub.s32 16, 16
      %149 = vsyncadd [#allocation4], %s148
      %s151 = sshll.u32 [#allocation10], 4
      %s152 = int_to_ptr.vmem [resolvable:$true] %s151
      %154 = dma.vmem_to_hbm [thread:$0]  %s152, 16, %s5, [#allocation4]
    $region41: #{tpu_custom_call.1} parent=1 // pred_fallthru
      _
    // Predicated region
    $region42: #{tpu_custom_call.1} parent=1 // pred_check
      _
    $region43: #{tpu_custom_call.1} parent=1 // pred_check_branch
      %156 = sbr.rel (0) target = $region45
    $region44: #{tpu_custom_call.1} parent=1 // pred_region
      %157 = dma.done [#allocation4], 16
    $region45: #{tpu_custom_call.1} parent=1 // pred_fallthru
      _
    %158 = vsyncpa [#allocation3], 1
    %159 = vsyncpa [#allocation8], 1
    %160 = vsyncpa [#allocation4], 1
    %161 = vsyncpa [#allocation5], 1

</llo_original>
